<compile_context>
chip_gen: v7x
topology: tpu7x:2x2x1
jax: 0.10.0
libtpu: 0.0.40
codegen_flags: <defaults>
</compile_context>

<pallas_src>
import functools

import jax
import jax.numpy as jnp
from jax.experimental import pallas as pl
from jax.experimental.pallas import tpu as pltpu

_LANE = 128      # lane width for the internal (VMEM-only) hidden dims
_SUBLANE = 8     # sublane granularity for batch tiles
_MIB = 1024 * 1024


def _round_up(n, m):
    return ((n + m - 1) // m) * m


# ---------------------------------------------------------------------------
# Kernel: whole MLP fused in VMEM. Matmuls hit the MXU in the weights'
# compute dtype (bf16 by default) with f32 accumulation; bias adds and ReLUs
# run on the VPU in f32.
# ---------------------------------------------------------------------------
def _mlp_kernel(x_ref, w1_ref, b1_ref, w2_ref, b2_ref, w3_ref, b3_ref, o_ref):
    cdt = w1_ref.dtype
    x = x_ref[...].astype(cdt)                       # f32 obs tile -> MXU dtype
    # Layer 1: Linear + ReLU
    h = jnp.dot(x, w1_ref[...], preferred_element_type=jnp.float32)
    h = jnp.maximum(h + b1_ref[...], 0.0)
    # Layer 2: Linear + ReLU
    h = jnp.dot(h.astype(cdt), w2_ref[...], preferred_element_type=jnp.float32)
    h = jnp.maximum(h + b2_ref[...], 0.0)
    # Output layer: Linear (no activation) -> un-padded d columns
    out = jnp.dot(h.astype(cdt), w3_ref[...], preferred_element_type=jnp.float32)
    o_ref[...] = (out + b3_ref[...]).astype(o_ref.dtype)


# ---------------------------------------------------------------------------
# One-time parameter prep (outside the jitted hot path).
# ---------------------------------------------------------------------------
def prepare_params(raw_params, *, compute_dtype=jnp.bfloat16):
    """Pad hidden fan-out dims to 128 (lane-dense internal operands) while
    keeping the true obs_dim fan-in on w1 and the true d fan-out on w3, so the
    HBM-facing input/output tiles carry no padding. Weights are cast to the
    MXU compute dtype; biases stay f32 as (1, fan_out) blocks."""
    w1 = jnp.asarray(raw_params["w1"], jnp.float32)
    w2 = jnp.asarray(raw_params["w2"], jnp.float32)
    w3 = jnp.asarray(raw_params["w3"], jnp.float32)
    b1 = jnp.asarray(raw_params["b1"], jnp.float32).reshape(1, -1)
    b2 = jnp.asarray(raw_params["b2"], jnp.float32).reshape(1, -1)
    b3 = jnp.asarray(raw_params["b3"], jnp.float32).reshape(1, -1)

    obs_dim, h1 = w1.shape
    _, h2 = w2.shape
    _, d = w3.shape
    h1_p, h2_p = _round_up(h1, _LANE), _round_up(h2, _LANE)

    # Zero-padded rows/cols and zero padded biases are numerically inert.
    w1_p = jnp.zeros((obs_dim, h1_p), jnp.float32).at[:, :h1].set(w1)
    w2_p = jnp.zeros((h1_p, h2_p), jnp.float32).at[:h1, :h2].set(w2)
    w3_p = jnp.zeros((h2_p, d), jnp.float32).at[:h2, :].set(w3)
    b1_p = jnp.zeros((1, h1_p), jnp.float32).at[:, :h1].set(b1)
    b2_p = jnp.zeros((1, h2_p), jnp.float32).at[:, :h2].set(b2)

    return {
        "w1": w1_p.astype(compute_dtype), "b1": b1_p,
        "w2": w2_p.astype(compute_dtype), "b2": b2_p,
        "w3": w3_p.astype(compute_dtype), "b3": b3,
    }


# ---------------------------------------------------------------------------
# Generation-aware sizing.
# ---------------------------------------------------------------------------
def _tpu_generation_info():
    """Return (vmem_budget_bytes, vmem_limit_bytes, num_tensorcores) with a
    conservative fallback when hardware introspection is unavailable."""
    vmem_bytes = None
    try:
        info = pltpu.get_tpu_info()
        for name in ("vmem_capacity_bytes", "vmem_bytes", "vmem_size_bytes"):
            v = getattr(info, name, None)
            if v:
                vmem_bytes = int(v)
                break
    except Exception:
        vmem_bytes = None

    if vmem_bytes is None:
        # Unknown hardware: conservative VMEM sizing, no forced grid split.
        return 24 * _MIB, 32 * _MIB, 1
    if vmem_bytes >= 100 * _MIB:
        # v5e / v6e: 128 MiB VMEM, single TensorCore per chip.
        return 64 * _MIB, 96 * _MIB, 1
    # v7x-like: 64 MiB VMEM per TensorCore, 2 TensorCores per chip.
    return 24 * _MIB, 32 * _MIB, 2


def _choose_block_b(batch, obs_dim, h1_p, h2_p, d, w_itemsize,
                    vmem_budget, num_cores):
    """Largest multiple-of-8 batch tile whose working set fits the VMEM
    budget; on dual-TensorCore chips the tile is shrunk so the "parallel"
    grid axis has an even number of steps (balanced across both cores)."""
    # Weights + biases counted x2: the auto-pipeline reserves 2 buffers even
    # for grid-invariant blocks (Buffered(1) would halve this; kept simple).
    weight_bytes = 2 * ((obs_dim * h1_p + h1_p * h2_p + h2_p * d) * w_itemsize
                        + (h1_p + h2_p + d) * 4)

    def working_set(b):
        io = 2 * b * obs_dim * 4 + 2 * b * d * 4               # x / out, double-buffered
        acts = b * (h1_p + h2_p) * (4 + w_itemsize)            # f32 intermediates + casts
        return io + acts + weight_bytes

    bb = _round_up(max(min(batch, 4096), _SUBLANE), _SUBLANE)
    while bb > _SUBLANE and working_set(bb) > vmem_budget:
        bb -= _SUBLANE

    # Dual-TC chips only (v7x): give the "parallel" axis an even step count.
    if num_cores >= 2 and batch > _SUBLANE:
        n = pl.cdiv(batch, bb)
        if n < 2 or n % 2 == 1:
            n = max(2, n + (n % 2))
            bb = _round_up(pl.cdiv(batch, n), _SUBLANE)
    return int(bb)


# ---------------------------------------------------------------------------
# Forward.
# ---------------------------------------------------------------------------
@functools.partial(jax.jit, static_argnames=("block_b",))
def mlp_encoder_forward(obs, params, *, block_b=None):
    """Pallas forward for MLPEncoder.

    obs:    [B, obs_dim] (cast to f32, like torch.as_tensor(obs, float32))
    params: output of prepare_params()
    returns [B, d] float32
    """
    obs = jnp.asarray(obs, jnp.float32)
    B, obs_dim = obs.shape
    w1, b1 = params["w1"], params["b1"]
    w2, b2 = params["w2"], params["b2"]
    w3, b3 = params["w3"], params["b3"]
    obs_dim_w, h1_p = w1.shape
    h2_p, d = w3.shape
    assert obs_dim == obs_dim_w, "obs feature dim must match w1 fan-in"
    compute_dtype = w1.dtype
    w_itemsize = jnp.dtype(compute_dtype).itemsize

    vmem_budget, vmem_limit, num_cores = _tpu_generation_info()
    if block_b is None:
        block_b = _choose_block_b(B, obs_dim, h1_p, h2_p, d, w_itemsize,
                                  vmem_budget, num_cores)
    # Tail block (if B % block_b != 0) computes on independent garbage rows
    # that are masked on store -- no batch padding / wrapper slice needed.
    n_blocks = pl.cdiv(B, block_b)

    flops = 2 * B * (obs_dim * h1_p + h1_p * h2_p + h2_p * d)
    bytes_accessed = int(
        obs.size * 4
        + sum(int(p.size) * p.dtype.itemsize for p in (w1, b1, w2, b2, w3, b3))
        + B * d * 4)

    invariant = lambda shape: pl.BlockSpec(shape, lambda i: (0, 0))

    out = pl.pallas_call(
        _mlp_kernel,
        out_shape=jax.ShapeDtypeStruct((B, d), jnp.float32),
        grid=(n_blocks,),
        in_specs=[
            pl.BlockSpec((block_b, obs_dim), lambda i: (i, 0)),  # un-padded obs tile
            invariant((obs_dim, h1_p)), invariant((1, h1_p)),
            invariant((h1_p, h2_p)),    invariant((1, h2_p)),
            invariant((h2_p, d)),       invariant((1, d)),
        ],
        out_specs=pl.BlockSpec((block_b, d), lambda i: (i, 0)),  # un-padded output
        compiler_params=pltpu.CompilerParams(
            dimension_semantics=("parallel",),
            vmem_limit_bytes=vmem_limit,
        ),
        cost_estimate=pl.CostEstimate(
            flops=flops, transcendentals=0, bytes_accessed=bytes_accessed),
    )(obs, w1, b1, w2, b2, w3, b3)
    return out


# ---------------------------------------------------------------------------
# Init / reference (PyTorch-Linear-equivalent semantics: y = x @ W^T + b).
# ---------------------------------------------------------------------------
def init_mlp_params(key, obs_dim, hidden_dims, d):
    """PyTorch nn.Linear-style init: U(-1/sqrt(fan_in), 1/sqrt(fan_in))."""
    dims = [obs_dim] + list(hidden_dims) + [d]
    params = {}
    for li, (fin, fout) in enumerate(zip(dims[:-1], dims[1:]), start=1):
        key, kw, kb = jax.random.split(key, 3)
        bound = 1.0 / float(fin) ** 0.5
        params[f"w{li}"] = jax.random.uniform(
            kw, (fin, fout), jnp.float32, minval=-bound, maxval=bound)
        params[f"b{li}"] = jax.random.uniform(
            kb, (1, fout), jnp.float32, minval=-bound, maxval=bound)
    return params


def mlp_reference(obs, raw_params):
    h = jnp.maximum(obs @ raw_params["w1"] + raw_params["b1"], 0.0)
    h = jnp.maximum(h @ raw_params["w2"] + raw_params["b2"], 0.0)
    return h @ raw_params["w3"] + raw_params["b3"]


if __name__ == "__main__":
    # Small shapes consistent with the module: obs_dimension=16,
    # hidden_dims=[32, 32], d (encoding dimension)=8.
    OBS_DIM, HIDDEN, D = 16, [32, 32], 8

    key = jax.random.PRNGKey(0)
    k_obs, k_obs2, k_par = jax.random.split(key, 3)
    raw_params = init_mlp_params(k_par, OBS_DIM, HIDDEN, D)

    # --- default bf16 compute path (v6e/v7x MXU fast path), batch = 8 -------
    obs = jax.random.normal(k_obs, (8, OBS_DIM), jnp.float32)
    params_bf16 = prepare_params(raw_params, compute_dtype=jnp.bfloat16)
    enc = jax.block_until_ready(mlp_encoder_forward(obs, params_bf16))
    # Forward-pass asserts mirroring the PyTorch module.
    assert enc.shape[0] == obs.shape[0]
    assert enc.shape[1] == D
    ref = mlp_reference(obs, raw_params)
    assert jnp.allclose(enc, ref, atol=5e-2, rtol=5e-2), "bf16 path mismatch vs reference"

    # --- f32 compute path, ragged batch of 20 (exercises the masked tail) ---
    obs2 = jax.random.normal(k_obs2, (20, OBS_DIM), jnp.float32)
    params_f32 = prepare_params(raw_params, compute_dtype=jnp.float32)
    enc2 = jax.block_until_ready(mlp_encoder_forward(obs2, params_f32))
    assert enc2.shape == (20, D)
    ref2 = mlp_reference(obs2, raw_params)
    assert jnp.allclose(enc2, ref2, atol=1e-5, rtol=1e-5), "f32 path mismatch vs reference"

    print("KERNEL_OK")
</pallas_src>

<mosaic_0001>
module attributes {stable_mosaic.version = 11 : i64} {
  func.func @_mlp_kernel(%arg0: i32, %arg1: memref<8x16xf32, #tpu.memory_space<vmem>>, %arg2: memref<16x128xbf16, #tpu.memory_space<vmem>>, %arg3: memref<1x128xf32, #tpu.memory_space<vmem>>, %arg4: memref<128x128xbf16, #tpu.memory_space<vmem>>, %arg5: memref<1x128xf32, #tpu.memory_space<vmem>>, %arg6: memref<128x8xbf16, #tpu.memory_space<vmem>>, %arg7: memref<1x8xf32, #tpu.memory_space<vmem>>, %arg8: memref<8x8xf32, #tpu.memory_space<vmem>>) attributes {dimension_semantics = [#tpu.dimension_semantics<parallel>], iteration_bounds = array<i64: 1>, scalar_prefetch = 0 : i64, scratch_operands = 0 : i64, tpu.core_type = #tpu.core_type<tc>, window_params = [{transform_indices = @transform_0, window_bounds = array<i64: 8, 16>}, {pipeline_mode = #tpu.pipeline_mode<synchronous>, transform_indices = @transform_1, window_bounds = array<i64: 16, 128>}, {pipeline_mode = #tpu.pipeline_mode<synchronous>, transform_indices = @transform_2, window_bounds = array<i64: 1, 128>}, {pipeline_mode = #tpu.pipeline_mode<synchronous>, transform_indices = @transform_3, window_bounds = array<i64: 128, 128>}, {pipeline_mode = #tpu.pipeline_mode<synchronous>, transform_indices = @transform_4, window_bounds = array<i64: 1, 128>}, {pipeline_mode = #tpu.pipeline_mode<synchronous>, transform_indices = @transform_5, window_bounds = array<i64: 128, 8>}, {pipeline_mode = #tpu.pipeline_mode<synchronous>, transform_indices = @transform_6, window_bounds = array<i64: 1, 8>}, {transform_indices = @transform_7, window_bounds = array<i64: 8, 8>}]} {
    %c0 = arith.constant 0 : index
    %c0_0 = arith.constant 0 : index
    %0 = vector.load %arg1[%c0, %c0_0] : memref<8x16xf32, #tpu.memory_space<vmem>>, vector<8x16xf32>
    %1 = arith.truncf %0 : vector<8x16xf32> to vector<8x16xbf16>
    %c0_1 = arith.constant 0 : index
    %c0_2 = arith.constant 0 : index
    %2 = vector.load %arg2[%c0_1, %c0_2] : memref<16x128xbf16, #tpu.memory_space<vmem>>, vector<16x128xbf16>
    %cst = arith.constant dense<0.000000e+00> : vector<8x128xf32>
    %3 = tpu.matmul %1, %2, %cst {dimension_numbers = #tpu.dot_dimension_numbers<[1], [0], [0], [1], [0, 0, 1, 1], [], []>} : vector<8x16xbf16>, vector<16x128xbf16>, vector<8x128xf32> -> vector<8x128xf32>
    %c0_3 = arith.constant 0 : index
    %c0_4 = arith.constant 0 : index
    %4 = vector.load %arg3[%c0_3, %c0_4] : memref<1x128xf32, #tpu.memory_space<vmem>>, vector<1x128xf32>
    %5 = vector.broadcast %4 : vector<1x128xf32> to vector<8x128xf32>
    %6 = arith.addf %3, %5 : vector<8x128xf32>
    %cst_5 = arith.constant 0.000000e+00 : f32
    %7 = vector.broadcast %cst_5 : f32 to vector<8x128xf32>
    %8 = arith.maximumf %6, %7 : vector<8x128xf32>
    %9 = arith.truncf %8 : vector<8x128xf32> to vector<8x128xbf16>
    %c0_6 = arith.constant 0 : index
    %c0_7 = arith.constant 0 : index
    %10 = vector.load %arg4[%c0_6, %c0_7] : memref<128x128xbf16, #tpu.memory_space<vmem>>, vector<128x128xbf16>
    %cst_8 = arith.constant dense<0.000000e+00> : vector<8x128xf32>
    %11 = tpu.matmul %9, %10, %cst_8 {dimension_numbers = #tpu.dot_dimension_numbers<[1], [0], [0], [1], [0, 0, 1, 1], [], []>} : vector<8x128xbf16>, vector<128x128xbf16>, vector<8x128xf32> -> vector<8x128xf32>
    %c0_9 = arith.constant 0 : index
    %c0_10 = arith.constant 0 : index
    %12 = vector.load %arg5[%c0_9, %c0_10] : memref<1x128xf32, #tpu.memory_space<vmem>>, vector<1x128xf32>
    %13 = vector.broadcast %12 : vector<1x128xf32> to vector<8x128xf32>
    %14 = arith.addf %11, %13 : vector<8x128xf32>
    %cst_11 = arith.constant 0.000000e+00 : f32
    %15 = vector.broadcast %cst_11 : f32 to vector<8x128xf32>
    %16 = arith.maximumf %14, %15 : vector<8x128xf32>
    %17 = arith.truncf %16 : vector<8x128xf32> to vector<8x128xbf16>
    %c0_12 = arith.constant 0 : index
    %c0_13 = arith.constant 0 : index
    %18 = vector.load %arg6[%c0_12, %c0_13] : memref<128x8xbf16, #tpu.memory_space<vmem>>, vector<128x8xbf16>
    %cst_14 = arith.constant dense<0.000000e+00> : vector<8x8xf32>
    %19 = tpu.matmul %17, %18, %cst_14 {dimension_numbers = #tpu.dot_dimension_numbers<[1], [0], [0], [1], [0, 0, 1, 1], [], []>} : vector<8x128xbf16>, vector<128x8xbf16>, vector<8x8xf32> -> vector<8x8xf32>
    %c0_15 = arith.constant 0 : index
    %c0_16 = arith.constant 0 : index
    %20 = vector.load %arg7[%c0_15, %c0_16] : memref<1x8xf32, #tpu.memory_space<vmem>>, vector<1x8xf32>
    %21 = vector.broadcast %20 : vector<1x8xf32> to vector<8x8xf32>
    %22 = arith.addf %19, %21 : vector<8x8xf32>
    %c0_17 = arith.constant 0 : index
    %c0_18 = arith.constant 0 : index
    %23 = vector.load %arg8[%c0_17, %c0_18] : memref<8x8xf32, #tpu.memory_space<vmem>>, vector<8x8xf32>
    tpu.vector_store %arg8[%c0_17, %c0_18], %22 {strides = array<i32>} : memref<8x8xf32, #tpu.memory_space<vmem>>, vector<8x8xf32>,
    return
  }
  func.func @transform_0(%arg0: i32) -> (i32, i32) {
    %c0_i32 = arith.constant 0 : i32
    %c0_i32_0 = arith.constant 0 : i32
    return %arg0, %c0_i32 : i32, i32
  }
  func.func @transform_1(%arg0: i32) -> (i32, i32) {
    %c0_i32 = arith.constant 0 : i32
    %c0_i32_0 = arith.constant 0 : i32
    %c0_i32_1 = arith.constant 0 : i32
    return %c0_i32, %c0_i32_0 : i32, i32
  }
  func.func @transform_2(%arg0: i32) -> (i32, i32) {
    %c0_i32 = arith.constant 0 : i32
    %c0_i32_0 = arith.constant 0 : i32
    %c0_i32_1 = arith.constant 0 : i32
    return %c0_i32, %c0_i32_0 : i32, i32
  }
  func.func @transform_3(%arg0: i32) -> (i32, i32) {
    %c0_i32 = arith.constant 0 : i32
    %c0_i32_0 = arith.constant 0 : i32
    %c0_i32_1 = arith.constant 0 : i32
    return %c0_i32, %c0_i32_0 : i32, i32
  }
  func.func @transform_4(%arg0: i32) -> (i32, i32) {
    %c0_i32 = arith.constant 0 : i32
    %c0_i32_0 = arith.constant 0 : i32
    %c0_i32_1 = arith.constant 0 : i32
    return %c0_i32, %c0_i32_0 : i32, i32
  }
  func.func @transform_5(%arg0: i32) -> (i32, i32) {
    %c0_i32 = arith.constant 0 : i32
    %c0_i32_0 = arith.constant 0 : i32
    %c0_i32_1 = arith.constant 0 : i32
    return %c0_i32, %c0_i32_0 : i32, i32
  }
  func.func @transform_6(%arg0: i32) -> (i32, i32) {
    %c0_i32 = arith.constant 0 : i32
    %c0_i32_0 = arith.constant 0 : i32
    %c0_i32_1 = arith.constant 0 : i32
    return %c0_i32, %c0_i32_0 : i32, i32
  }
  func.func @transform_7(%arg0: i32) -> (i32, i32) {
    %c0_i32 = arith.constant 0 : i32
    %c0_i32_0 = arith.constant 0 : i32
    return %arg0, %c0_i32 : i32, i32
  }
}

</mosaic_0001>

<llo_original>
// kernel: mlp_encoder_forward.1
$region0: #{mlp_encoder_forward.1}
  #allocation0 [shape = 'u32[]', space=smem, size = 0x4, offset = 0x4, fixed_abs, tag = 'smem constant byte address 0x4 - core index']
  #allocation1 [shape = 'u32[144,128]{1,0:T(1,128)}', space=vmem, size = 0x12000, scoped, tag = 'internal scratch']
  %s0 = inlined_call_operand.vmem [shape: f32[8,16], index: 0, kind: input, shape index: {}]
  %s1 = inlined_call_operand.vmem [shape: bf16[16,128], index: 1, kind: input, shape index: {}]
  %s2 = inlined_call_operand.vmem [shape: f32[1,128], index: 2, kind: input, shape index: {}]
  %s3 = inlined_call_operand.vmem [shape: bf16[128,128], index: 3, kind: input, shape index: {}]
  %s4 = inlined_call_operand.vmem [shape: f32[1,128], index: 4, kind: input, shape index: {}]
  %s5 = inlined_call_operand.vmem [shape: bf16[128,8], index: 5, kind: input, shape index: {}]
  %s6 = inlined_call_operand.vmem [shape: f32[1,8], index: 6, kind: input, shape index: {}]
  %s7 = inlined_call_operand.hbm [shape: f32[8,8], index: 7, kind: output, shape index: {}]
  %s8 = sld [smem:[#allocation0]]
  $region38: #{mlp_encoder_forward.1} parent=0
    _
  %s10 = ssub.s32 1, %s8
  %s11 = scalar_select 0, %s10, %s8
  $region1: #{mlp_encoder_forward.1} parent=0
    #allocation2 [shape = 'u8[4096]{0}', space=vmem, size = 0x1000, scoped, tag = 'output window, operand 0, single buffered']
    #allocation3 [shape = 's32[1]{0}', space=sflag, size = 0x4, scoped, tag = 'scoped memory for mlp_encoder_forward.1']
    %12 = vsyncpa [#allocation3], 0
    // Predicated region
    $region2: #{mlp_encoder_forward.1} parent=1 // pred_check
      _
    $region3: #{mlp_encoder_forward.1} parent=1 // pred_check_branch
      %14 = sbr.rel (0) target = $region5
    $region4: #{mlp_encoder_forward.1} parent=1 // pred_region
      _
    $region5: #{mlp_encoder_forward.1} parent=1 // pred_fallthru
      _
    // Predicated region
    $region6: #{mlp_encoder_forward.1} parent=1 // pred_check
      _
    $region7: #{mlp_encoder_forward.1} parent=1 // pred_check_branch
      %16 = sbr.rel (0) target = $region9
    $region8: #{mlp_encoder_forward.1} parent=1 // pred_region
      _
    $region9: #{mlp_encoder_forward.1} parent=1 // pred_fallthru
      _
    // Predicated region
    $region10: #{mlp_encoder_forward.1} parent=1 // pred_check
      _
    $region11: #{mlp_encoder_forward.1} parent=1 // pred_check_branch
      %18 = sbr.rel (0) target = $region13
    $region12: #{mlp_encoder_forward.1} parent=1 // pred_region
      _
    $region13: #{mlp_encoder_forward.1} parent=1 // pred_fallthru
      _
    // Predicated region
    $region14: #{mlp_encoder_forward.1} parent=1 // pred_check
      _
    $region15: #{mlp_encoder_forward.1} parent=1 // pred_check_branch
      %20 = sbr.rel (0) target = $region17
    $region16: #{mlp_encoder_forward.1} parent=1 // pred_region
      _
    $region17: #{mlp_encoder_forward.1} parent=1 // pred_fallthru
      _
    // Predicated region
    $region18: #{mlp_encoder_forward.1} parent=1 // pred_check
      _
    $region19: #{mlp_encoder_forward.1} parent=1 // pred_check_branch
      %22 = sbr.rel (0) target = $region21
    $region20: #{mlp_encoder_forward.1} parent=1 // pred_region
      _
    $region21: #{mlp_encoder_forward.1} parent=1 // pred_fallthru
      _
    // Predicated region
    $region22: #{mlp_encoder_forward.1} parent=1 // pred_check
      _
    $region23: #{mlp_encoder_forward.1} parent=1 // pred_check_branch
      %24 = sbr.rel (0) target = $region25
    $region24: #{mlp_encoder_forward.1} parent=1 // pred_region
      _
    $region25: #{mlp_encoder_forward.1} parent=1 // pred_fallthru
      _
    // Predicated region
    $region26: #{mlp_encoder_forward.1} parent=1 // pred_check
      _
    $region27: #{mlp_encoder_forward.1} parent=1 // pred_check_branch
      %26 = sbr.rel (0) target = $region29
    $region28: #{mlp_encoder_forward.1} parent=1 // pred_region
      _
    $region29: #{mlp_encoder_forward.1} parent=1 // pred_fallthru
      _
    %v28 = vld [vmem:[%s0] sm:$0xff]
    %v29 = vpack.c.bf16 %v28, %v28
    %v30 = vld [vmem:[%s1] sm:$0xf]
    %v31 = vld [vmem:[%s1 + $0x4] sm:$0xf]
    %v32 = vld [vmem:[%s2] sm:$0x1]
    %v34 = vlaneseq
    %v35 = vshrl.u32 %v34, 7
    %v36 = vsub.s32 0, %v35
    %v37 = vrot.slane %v32, %v36
    %v41 = vunpack.c.l.b16 %v30
    %v42 = vunpack.c.l.b16 %v31
    %v43 = vpack.c.b16 %v42, %v41
    %vm45 = vcmask 130048
    %v47 = vsel %vm45, %v29, 0
    %49 = vmatprep.subr.bf16.mxu0 0
    %50 = vmatpush1.bf16.msra.mxu0 %v43
    %51 = vmatprep.subr.bf16.mxu0 0
    %52 = vmatpush1.bf16.msra.mxu0 0
    %53 = vmatprep.subr.bf16.mxu0 0
    %54 = vmatpush1.bf16.msra.mxu0 0
    %55 = vmatprep.subr.bf16.mxu0 0
    %56 = vmatpush1.bf16.msra.mxu0 0
    %57 = vmatprep.subr.bf16.mxu0 0
    %58 = vmatpush1.bf16.msra.mxu0 0
    %59 = vmatprep.subr.bf16.mxu0 0
    %60 = vmatpush1.bf16.msra.mxu0 0
    %61 = vmatprep.subr.bf16.mxu0 0
    %62 = vmatpush1.bf16.msra.mxu0 0
    %63 = vmatprep.subr.bf16.mxu0 0
    %64 = vmatpush1.bf16.msra.mxu0 0
    %65 = vmatprep.subr.bf16.mxu0 0
    %66 = vmatpush1.bf16.msra.mxu0 0
    %67 = vmatprep.subr.bf16.mxu0 0
    %68 = vmatpush1.bf16.msra.mxu0 0
    %69 = vmatprep.subr.bf16.mxu0 0
    %70 = vmatpush1.bf16.msra.mxu0 0
    %71 = vmatprep.subr.bf16.mxu0 0
    %72 = vmatpush1.bf16.msra.mxu0 0
    %73 = vmatprep.subr.bf16.mxu0 0
    %74 = vmatpush1.bf16.msra.mxu0 0
    %75 = vmatprep.subr.bf16.mxu0 0
    %76 = vmatpush1.bf16.msra.mxu0 0
    %77 = vmatprep.subr.bf16.mxu0 0
    %78 = vmatpush1.bf16.msra.mxu0 0
    %79 = vmatprep.subr.bf16.mxu0 0
    %80 = vmatpush1.bf16.msra.mxu0 0
    %81 = vmatprep.mubr.bf16.mxu0 0
    %82 = vmatmul.mubr.bf16.gmra.mrb[0].mxu0 %v47
    %v83 = vpop.f32.mrb[0].mxu0
    %v84 = vadd.f32 %v37, %v83
    %v85 = vpop.f32.mrb[0].mxu0
    %v86 = vpop.f32.mrb[0].mxu0
    %v87 = vpop.f32.mrb[0].mxu0
    %88 = vdwg.mxu0
    %v89 = vmax.f32 %v84, 0.0
    %v90 = vpack.c.bf16 %v89, %v89
    %v91 = vld [vmem:[%s3] sm:$0xf]
    %v92 = vld [vmem:[%s3 + $0x4] sm:$0xf]
    %v93 = vld [vmem:[%s3 + $0x8] sm:$0xf]
    %v94 = vld [vmem:[%s3 + $0xc] sm:$0xf]
    %v95 = vld [vmem:[%s3 + $0x10] sm:$0xf]
    %v96 = vld [vmem:[%s3 + $0x14] sm:$0xf]
    %v97 = vld [vmem:[%s3 + $0x18] sm:$0xf]
    %v98 = vld [vmem:[%s3 + $0x1c] sm:$0xf]
    %v99 = vld [vmem:[%s3 + $0x20] sm:$0xf]
    %v100 = vld [vmem:[%s3 + $0x24] sm:$0xf]
    %v101 = vld [vmem:[%s3 + $0x28] sm:$0xf]
    %v102 = vld [vmem:[%s3 + $0x2c] sm:$0xf]
    %v103 = vld [vmem:[%s3 + $0x30] sm:$0xf]
    %v104 = vld [vmem:[%s3 + $0x34] sm:$0xf]
    %v105 = vld [vmem:[%s3 + $0x38] sm:$0xf]
    %v106 = vld [vmem:[%s3 + $0x3c] sm:$0xf]
    %v107 = vld [vmem:[%s4] sm:$0x1]
    %v109 = vlaneseq
    %v110 = vshrl.u32 %v109, 7
    %v111 = vsub.s32 0, %v110
    %v112 = vrot.slane %v107, %v111
    %v130 = vunpack.c.l.b16 %v91
    %v131 = vunpack.c.l.b16 %v92
    %v132 = vunpack.c.l.b16 %v93
    %v133 = vunpack.c.l.b16 %v94
    %v134 = vunpack.c.l.b16 %v95
    %v135 = vunpack.c.l.b16 %v96
    %v136 = vunpack.c.l.b16 %v97
    %v137 = vunpack.c.l.b16 %v98
    %v138 = vunpack.c.l.b16 %v99
    %v139 = vunpack.c.l.b16 %v100
    %v140 = vunpack.c.l.b16 %v101
    %v141 = vunpack.c.l.b16 %v102
    %v142 = vunpack.c.l.b16 %v103
    %v143 = vunpack.c.l.b16 %v104
    %v144 = vunpack.c.l.b16 %v105
    %v145 = vunpack.c.l.b16 %v106
    %v146 = vpack.c.b16 %v131, %v130
    %v147 = vpack.c.b16 %v133, %v132
    %v148 = vpack.c.b16 %v135, %v134
    %v149 = vpack.c.b16 %v137, %v136
    %v150 = vpack.c.b16 %v139, %v138
    %v151 = vpack.c.b16 %v141, %v140
    %v152 = vpack.c.b16 %v143, %v142
    %v153 = vpack.c.b16 %v145, %v144
    %162 = vmatprep.subr.bf16.mxu0 0
    %163 = vmatpush1.bf16.msra.mxu0 %v146
    %164 = vmatprep.subr.bf16.mxu0 0
    %165 = vmatpush1.bf16.msra.mxu0 %v147
    %166 = vmatprep.subr.bf16.mxu0 0
    %167 = vmatpush1.bf16.msra.mxu0 %v148
    %168 = vmatprep.subr.bf16.mxu0 0
    %169 = vmatpush1.bf16.msra.mxu0 %v149
    %170 = vmatprep.subr.bf16.mxu0 0
    %171 = vmatpush1.bf16.msra.mxu0 %v150
    %172 = vmatprep.subr.bf16.mxu0 0
    %173 = vmatpush1.bf16.msra.mxu0 %v151
    %174 = vmatprep.subr.bf16.mxu0 0
    %175 = vmatpush1.bf16.msra.mxu0 %v152
    %176 = vmatprep.subr.bf16.mxu0 0
    %177 = vmatpush1.bf16.msra.mxu0 %v153
    %178 = vmatprep.subr.bf16.mxu0 0
    %179 = vmatpush1.bf16.msra.mxu0 0
    %180 = vmatprep.subr.bf16.mxu0 0
    %181 = vmatpush1.bf16.msra.mxu0 0
    %182 = vmatprep.subr.bf16.mxu0 0
    %183 = vmatpush1.bf16.msra.mxu0 0
    %184 = vmatprep.subr.bf16.mxu0 0
    %185 = vmatpush1.bf16.msra.mxu0 0
    %186 = vmatprep.subr.bf16.mxu0 0
    %187 = vmatpush1.bf16.msra.mxu0 0
    %188 = vmatprep.subr.bf16.mxu0 0
    %189 = vmatpush1.bf16.msra.mxu0 0
    %190 = vmatprep.subr.bf16.mxu0 0
    %191 = vmatpush1.bf16.msra.mxu0 0
    %192 = vmatprep.subr.bf16.mxu0 0
    %193 = vmatpush1.bf16.msra.mxu0 0
    %194 = vmatprep.mubr.bf16.mxu0 0
    %195 = vmatmul.mubr.bf16.gmra.mrb[0].mxu0 %v90
    %v196 = vpop.f32.mrb[0].mxu0
    %v197 = vadd.f32 %v112, %v196
    %v198 = vpop.f32.mrb[0].mxu0
    %v199 = vpop.f32.mrb[0].mxu0
    %v200 = vpop.f32.mrb[0].mxu0
    %201 = vdwg.mxu0
    %v202 = vmax.f32 %v197, 0.0
    %v203 = vpack.c.bf16 %v202, %v202
    %v204 = vld [vmem:[%s5] sm:$0xf]
    %v205 = vld [vmem:[%s5 + $0x4] sm:$0xf]
    %v206 = vld [vmem:[%s5 + $0x8] sm:$0xf]
    %v207 = vld [vmem:[%s5 + $0xc] sm:$0xf]
    %v208 = vld [vmem:[%s5 + $0x10] sm:$0xf]
    %v209 = vld [vmem:[%s5 + $0x14] sm:$0xf]
    %v210 = vld [vmem:[%s5 + $0x18] sm:$0xf]
    %v211 = vld [vmem:[%s5 + $0x1c] sm:$0xf]
    %v212 = vld [vmem:[%s5 + $0x20] sm:$0xf]
    %v213 = vld [vmem:[%s5 + $0x24] sm:$0xf]
    %v214 = vld [vmem:[%s5 + $0x28] sm:$0xf]
    %v215 = vld [vmem:[%s5 + $0x2c] sm:$0xf]
    %v216 = vld [vmem:[%s5 + $0x30] sm:$0xf]
    %v217 = vld [vmem:[%s5 + $0x34] sm:$0xf]
    %v218 = vld [vmem:[%s5 + $0x38] sm:$0xf]
    %v219 = vld [vmem:[%s5 + $0x3c] sm:$0xf]
    %v220 = vld [vmem:[%s6] sm:$0x1]
    %v222 = vlaneseq
    %v223 = vshrl.u32 %v222, 7
    %v224 = vsub.s32 0, %v223
    %v225 = vrot.slane %v220, %v224
    %v243 = vunpack.c.l.b16 %v204
    %v244 = vunpack.c.l.b16 %v205
    %v245 = vunpack.c.l.b16 %v206
    %v246 = vunpack.c.l.b16 %v207
    %v247 = vunpack.c.l.b16 %v208
    %v248 = vunpack.c.l.b16 %v209
    %v249 = vunpack.c.l.b16 %v210
    %v250 = vunpack.c.l.b16 %v211
    %v251 = vunpack.c.l.b16 %v212
    %v252 = vunpack.c.l.b16 %v213
    %v253 = vunpack.c.l.b16 %v214
    %v254 = vunpack.c.l.b16 %v215
    %v255 = vunpack.c.l.b16 %v216
    %v256 = vunpack.c.l.b16 %v217
    %v257 = vunpack.c.l.b16 %v218
    %v258 = vunpack.c.l.b16 %v219
    %v259 = vpack.c.b16 %v244, %v243
    %v260 = vpack.c.b16 %v246, %v245
    %v261 = vpack.c.b16 %v248, %v247
    %v262 = vpack.c.b16 %v250, %v249
    %v263 = vpack.c.b16 %v252, %v251
    %v264 = vpack.c.b16 %v254, %v253
    %v265 = vpack.c.b16 %v256, %v255
    %v266 = vpack.c.b16 %v258, %v257
    %275 = vmatprep.subr.bf16.mxu0 0
    %276 = vmatpush1.bf16.msra.mxu0 %v259
    %277 = vmatprep.subr.bf16.mxu0 0
    %278 = vmatpush1.bf16.msra.mxu0 %v260
    %279 = vmatprep.subr.bf16.mxu0 0
    %280 = vmatpush1.bf16.msra.mxu0 %v261
    %281 = vmatprep.subr.bf16.mxu0 0
    %282 = vmatpush1.bf16.msra.mxu0 %v262
    %283 = vmatprep.subr.bf16.mxu0 0
    %284 = vmatpush1.bf16.msra.mxu0 %v263
    %285 = vmatprep.subr.bf16.mxu0 0
    %286 = vmatpush1.bf16.msra.mxu0 %v264
    %287 = vmatprep.subr.bf16.mxu0 0
    %288 = vmatpush1.bf16.msra.mxu0 %v265
    %289 = vmatprep.subr.bf16.mxu0 0
    %290 = vmatpush1.bf16.msra.mxu0 %v266
    %291 = vmatprep.subr.bf16.mxu0 0
    %292 = vmatpush1.bf16.msra.mxu0 0
    %293 = vmatprep.subr.bf16.mxu0 0
    %294 = vmatpush1.bf16.msra.mxu0 0
    %295 = vmatprep.subr.bf16.mxu0 0
    %296 = vmatpush1.bf16.msra.mxu0 0
    %297 = vmatprep.subr.bf16.mxu0 0
    %298 = vmatpush1.bf16.msra.mxu0 0
    %299 = vmatprep.subr.bf16.mxu0 0
    %300 = vmatpush1.bf16.msra.mxu0 0
    %301 = vmatprep.subr.bf16.mxu0 0
    %302 = vmatpush1.bf16.msra.mxu0 0
    %303 = vmatprep.subr.bf16.mxu0 0
    %304 = vmatpush1.bf16.msra.mxu0 0
    %305 = vmatprep.subr.bf16.mxu0 0
    %306 = vmatpush1.bf16.msra.mxu0 0
    %307 = vmatprep.mubr.bf16.mxu0 0
    %308 = vmatmul.mubr.bf16.gmra.mrb[0].mxu0 %v203
    %v309 = vpop.f32.mrb[0].mxu0
    %v310 = vadd.f32 %v225, %v309
    %v311 = vpop.f32.mrb[0].mxu0
    %v312 = vpop.f32.mrb[0].mxu0
    %v313 = vpop.f32.mrb[0].mxu0
    %314 = vdwg.mxu0
    %vm315 = vcmask 64512
    %316 = vst.msk [vmem:[#allocation2] sm:$0xff] %vm315, %v310
    // Predicated region
    $region30: #{mlp_encoder_forward.1} parent=1 // pred_check
      _
    $region31: #{mlp_encoder_forward.1} parent=1 // pred_check_branch
      %318 = sbr.rel (0) target = $region33
    $region32: #{mlp_encoder_forward.1} parent=1 // pred_region
      %s320 = ssub.s32 128, 128
      %321 = vsyncadd [#allocation3], %s320
      %s323 = sshll.u32 [#allocation2], 4
      %s324 = int_to_ptr.vmem [resolvable:$true] %s323
      %326 = dma.vmem_to_hbm [thread:$0]  %s324, 128, %s7, [#allocation3]
    $region33: #{mlp_encoder_forward.1} parent=1 // pred_fallthru
      _
    // Predicated region
    $region34: #{mlp_encoder_forward.1} parent=1 // pred_check
      _
    $region35: #{mlp_encoder_forward.1} parent=1 // pred_check_branch
      %328 = sbr.rel (0) target = $region37
    $region36: #{mlp_encoder_forward.1} parent=1 // pred_region
      %329 = dma.done [#allocation3], 128
    $region37: #{mlp_encoder_forward.1} parent=1 // pred_fallthru
      _
    %330 = vsyncpa [#allocation3], 1

</llo_original>
